<compile_context>
chip_gen: v6e
topology: v6e:2x2x1
jax: 0.10.0
libtpu: 0.0.40
codegen_flags: <defaults>
</compile_context>

<pallas_src>
import math
import functools

import jax
import jax.numpy as jnp
from jax.experimental import pallas as pl
from jax.experimental.pallas import tpu as pltpu


def _round_down_mult8(x: int) -> int:
    return (x // 8) * 8


def _choose_tile(total: int, preferred: int) -> int:
    """Largest tile t <= preferred with total % t == 0 and (t % 8 == 0 or t == total)."""
    if total <= preferred:
        return total
    t = _round_down_mult8(preferred)
    while t >= 8:
        if total % t == 0:
            return t
        t -= 8
    return total  # no aligned divisor: fall back to a single full-size tile


def _embedding_kernel(ids_ref, table_ref, out_ref, acc_ref, *, scale):
    # ids_ref  : (tm, 1)        int32   token ids for this token tile
    # table_ref: (tv, d_model)  table dtype, current vocab tile
    # out_ref  : (tm, d_model)  f32     (resident across the vocab axis)
    # acc_ref  : (tm, d_model)  f32     VMEM accumulator scratch
    k = pl.program_id(1)

    @pl.when(k == 0)
    def _():
        acc_ref[...] = jnp.zeros_like(acc_ref)

    ids = ids_ref[...]                    # (tm, 1)
    tm = ids.shape[0]
    tv = table_ref.shape[0]

    # Global vocab index covered by this tile: [k*tv, (k+1)*tv).
    local = jax.lax.broadcasted_iota(jnp.int32, (tm, tv), 1) + k * tv
    # One-hot with sqrt(d_model) folded into the select constant (exact in f32).
    onehot = jnp.where(local == ids, scale, 0.0).astype(table_ref.dtype)

    acc_ref[...] += jnp.dot(onehot, table_ref[...],
                            preferred_element_type=jnp.float32)

    @pl.when(k == pl.num_programs(1) - 1)
    def _():
        out_ref[...] = acc_ref[...].astype(out_ref.dtype)


def input_embeddings(x, table, *, tm=None, tv=None):
    """x: (batch, seq) int token ids; table: (vocab, d_model) embedding weight."""
    batch, seq = x.shape
    vocab, d_model = table.shape
    n = batch * seq
    scale = float(math.sqrt(d_model))

    # --- tile selection under an explicit VMEM budget (~2 MiB per tile kind) ---
    if tm is None:
        tm = min(256, max(8, _round_down_mult8((2 * 1024 * 1024) // (4 * d_model))))
    tm = _choose_tile(n, tm)
    if tv is None:
        tv = min(2048, max(8, _round_down_mult8(
            (2 * 1024 * 1024) // (4 * max(d_model, tm)))))
    tv = _choose_tile(vocab, tv)

    ids = x.reshape(n, 1).astype(jnp.int32)
    grid = (n // tm, vocab // tv)

    out = pl.pallas_call(
        functools.partial(_embedding_kernel, scale=scale),
        out_shape=jax.ShapeDtypeStruct((n, d_model), jnp.float32),
        grid_spec=pltpu.PrefetchScalarGridSpec(
            num_scalar_prefetch=0,
            grid=grid,
            in_specs=[
                # token-id tile: varies only with the token-tile axis
                pl.BlockSpec((tm, 1), lambda i, k: (i, 0)),
                # vocab tile of the embedding table: varies with the vocab axis
                pl.BlockSpec((tv, d_model), lambda i, k: (k, 0)),
            ],
            # output tile is resident across the vocab (reduction) axis
            out_specs=pl.BlockSpec((tm, d_model), lambda i, k: (i, 0)),
            scratch_shapes=[pltpu.VMEM((tm, d_model), jnp.float32)],
        ),
        compiler_params=pltpu.CompilerParams(
            dimension_semantics=("parallel", "arbitrary"),
            vmem_limit_bytes=32 * 1024 * 1024,
        ),
    )(ids, table)

    return out.reshape(batch, seq, d_model)


if __name__ == "__main__":
    batch, seq = 2, 8
    d_model, vocab_size = 32, 64

    key = jax.random.PRNGKey(0)
    k_ids, k_w = jax.random.split(key)

    # Deterministic "parameters": nn.Embedding default init is N(0, 1).
    table = jax.random.normal(k_w, (vocab_size, d_model), dtype=jnp.float32)
    # Token ids.
    x = jax.random.randint(k_ids, (batch, seq), 0, vocab_size, dtype=jnp.int32)

    out = input_embeddings(x, table)
    out = jax.block_until_ready(out)

    # Reference: plain JAX gather * sqrt(d_model).
    ref = jnp.take(table, x, axis=0) * math.sqrt(d_model)
    assert out.shape == (batch, seq, d_model)
    assert jnp.allclose(out, ref, atol=1e-5, rtol=1e-5), "mismatch vs reference"

    print("KERNEL_OK")
</pallas_src>

<mosaic_0001>
module attributes {stable_mosaic.version = 11 : i64} {
  func.func @_embedding_kernel(%arg0: i32, %arg1: i32, %arg2: memref<16x1xi32, #tpu.memory_space<vmem>>, %arg3: memref<64x32xf32, #tpu.memory_space<vmem>>, %arg4: memref<16x32xf32, #tpu.memory_space<vmem>>, %arg5: memref<16x32xf32, #tpu.memory_space<vmem>>) attributes {dimension_semantics = [#tpu.dimension_semantics<parallel>, #tpu.dimension_semantics<arbitrary>], iteration_bounds = array<i64: 1, 1>, scalar_prefetch = 0 : i64, scratch_operands = 1 : i64, tpu.core_type = #tpu.core_type<tc>, window_params = [{transform_indices = @transform_0, window_bounds = array<i64: 16, 1>}, {transform_indices = @transform_1, window_bounds = array<i64: 64, 32>}, {transform_indices = @transform_2, window_bounds = array<i64: 16, 32>}]} {
    %c0_i32 = arith.constant 0 : i32
    %0 = arith.cmpi eq, %arg1, %c0_i32 : i32
    %1 = arith.extui %0 : i1 to i32
    %c0_i32_0 = arith.constant 0 : i32
    %2 = arith.cmpi ne, %1, %c0_i32_0 : i32
    scf.if %2 {
      %cst_12 = arith.constant 0.000000e+00 : f32
      %21 = vector.broadcast %cst_12 : f32 to vector<16x32xf32>
      %c0_13 = arith.constant 0 : index
      %c0_14 = arith.constant 0 : index
      %22 = vector.load %arg5[%c0_13, %c0_14] : memref<16x32xf32, #tpu.memory_space<vmem>>, vector<16x32xf32>
      tpu.vector_store %arg5[%c0_13, %c0_14], %21 {strides = array<i32>} : memref<16x32xf32, #tpu.memory_space<vmem>>, vector<16x32xf32>,
    } else {
    }
    %c0 = arith.constant 0 : index
    %c0_1 = arith.constant 0 : index
    %3 = vector.load %arg2[%c0, %c0_1] : memref<16x1xi32, #tpu.memory_space<vmem>>, vector<16x1xi32>
    %4 = tpu.iota {dimensions = array<i32: 1>} : vector<16x64xi32>
    %c64_i32 = arith.constant 64 : i32
    %5 = arith.muli %arg1, %c64_i32 : i32
    %6 = vector.broadcast %5 : i32 to vector<16x64xi32>
    %7 = arith.addi %4, %6 : vector<16x64xi32>
    %8 = vector.broadcast %3 : vector<16x1xi32> to vector<16x64xi32>
    %9 = arith.cmpi eq, %7, %8 : vector<16x64xi32>
    %cst = arith.constant 5.65685415 : f32
    %cst_2 = arith.constant 0.000000e+00 : f32
    %10 = vector.broadcast %cst : f32 to vector<16x64xf32>
    %11 = vector.broadcast %cst_2 : f32 to vector<16x64xf32>
    %12 = arith.select %9, %10, %11 : vector<16x64xi1>, vector<16x64xf32>
    %c0_3 = arith.constant 0 : index
    %c0_4 = arith.constant 0 : index
    %13 = vector.load %arg5[%c0_3, %c0_4] : memref<16x32xf32, #tpu.memory_space<vmem>>, vector<16x32xf32>
    %c0_5 = arith.constant 0 : index
    %c0_6 = arith.constant 0 : index
    %14 = vector.load %arg3[%c0_5, %c0_6] : memref<64x32xf32, #tpu.memory_space<vmem>>, vector<64x32xf32>
    %cst_7 = arith.constant dense<0.000000e+00> : vector<16x32xf32>
    %15 = tpu.matmul %12, %14, %cst_7 {dimension_numbers = #tpu.dot_dimension_numbers<[1], [0], [0], [1], [0, 0, 1, 1], [], []>} : vector<16x64xf32>, vector<64x32xf32>, vector<16x32xf32> -> vector<16x32xf32>
    %16 = arith.addf %13, %15 : vector<16x32xf32>
    %c0_8 = arith.constant 0 : index
    %c0_9 = arith.constant 0 : index
    %17 = vector.load %arg5[%c0_8, %c0_9] : memref<16x32xf32, #tpu.memory_space<vmem>>, vector<16x32xf32>
    tpu.vector_store %arg5[%c0_8, %c0_9], %16 {strides = array<i32>} : memref<16x32xf32, #tpu.memory_space<vmem>>, vector<16x32xf32>,
    %c0_i32_10 = arith.constant 0 : i32
    %18 = arith.cmpi eq, %arg1, %c0_i32_10 : i32
    %19 = arith.extui %18 : i1 to i32
    %c0_i32_11 = arith.constant 0 : i32
    %20 = arith.cmpi ne, %19, %c0_i32_11 : i32
    scf.if %20 {
      %c0_12 = arith.constant 0 : index
      %c0_13 = arith.constant 0 : index
      %21 = vector.load %arg5[%c0_12, %c0_13] : memref<16x32xf32, #tpu.memory_space<vmem>>, vector<16x32xf32>
      %c0_14 = arith.constant 0 : index
      %c0_15 = arith.constant 0 : index
      %22 = vector.load %arg4[%c0_14, %c0_15] : memref<16x32xf32, #tpu.memory_space<vmem>>, vector<16x32xf32>
      tpu.vector_store %arg4[%c0_14, %c0_15], %21 {strides = array<i32>} : memref<16x32xf32, #tpu.memory_space<vmem>>, vector<16x32xf32>,
    } else {
    }
    return
  }
  func.func @transform_0(%arg0: i32, %arg1: i32) -> (i32, i32) {
    %c0_i32 = arith.constant 0 : i32
    %c0_i32_0 = arith.constant 0 : i32
    return %arg0, %c0_i32 : i32, i32
  }
  func.func @transform_1(%arg0: i32, %arg1: i32) -> (i32, i32) {
    %c0_i32 = arith.constant 0 : i32
    %c0_i32_0 = arith.constant 0 : i32
    return %arg1, %c0_i32 : i32, i32
  }
  func.func @transform_2(%arg0: i32, %arg1: i32) -> (i32, i32) {
    %c0_i32 = arith.constant 0 : i32
    %c0_i32_0 = arith.constant 0 : i32
    return %arg0, %c0_i32 : i32, i32
  }
}

</mosaic_0001>

<llo_original>
// kernel: tpu_custom_call.1
$region0: #{tpu_custom_call.1}
  #allocation0 [shape = 'u32[]', space=smem, size = 0x4, offset = 0x4, fixed_abs, tag = 'smem constant byte address 0x4 - core index']
  #allocation1 [shape = 'u32[144,128]{1,0:T(1,128)}', space=vmem, size = 0x12000, scoped, tag = 'internal scratch']
  #allocation2 [shape = 'f32[16,32]{1,0:T(8,128)}', space=vmem, size = 0x2000, scoped, tag = 'scratch operand']
  %s0 = inlined_call_operand.vmem [shape: s32[16,1], index: 0, kind: input, shape index: {}]
  %s1 = inlined_call_operand.vmem [shape: f32[64,32], index: 1, kind: input, shape index: {}]
  %s2 = inlined_call_operand.hbm [shape: f32[16,32], index: 2, kind: output, shape index: {}]
  %s3 = sld [smem:[#allocation0]]
  $region26: #{tpu_custom_call.1} parent=0
    _
  %s5 = ssub.s32 1, %s3
  %s6 = scalar_select 0, %s5, %s3
  $region1: #{tpu_custom_call.1} parent=0
    #allocation3 [shape = 'u8[8192]{0}', space=vmem, size = 0x2000, scoped, tag = 'output window, operand 0, single buffered']
    #allocation4 [shape = 's32[1]{0}', space=sflag, size = 0x4, scoped, tag = 'scoped memory for tpu_custom_call.1']
    %7 = vsyncpa [#allocation4], 0
    // Predicated region
    $region2: #{tpu_custom_call.1} parent=1 // pred_check
      _
    $region3: #{tpu_custom_call.1} parent=1 // pred_check_branch
      %9 = sbr.rel (0) target = $region5
    $region4: #{tpu_custom_call.1} parent=1 // pred_region
      _
    $region5: #{tpu_custom_call.1} parent=1 // pred_fallthru
      _
    // Predicated region
    $region6: #{tpu_custom_call.1} parent=1 // pred_check
      _
    $region7: #{tpu_custom_call.1} parent=1 // pred_check_branch
      %11 = sbr.rel (0) target = $region9
    $region8: #{tpu_custom_call.1} parent=1 // pred_region
      _
    $region9: #{tpu_custom_call.1} parent=1 // pred_fallthru
      _
    %p12 = scmp.eq.s32.totalorder 0, 0
    // Predicated region
    $region10: #{tpu_custom_call.1} parent=1 // pred_check
      %p13 = pneg %p12
    $region11: #{tpu_custom_call.1} parent=1 // pred_check_branch
      %15 = sbr.rel (%p13) target = $region13
    $region12: #{tpu_custom_call.1} parent=1 // pred_region
      %vm16 = vcmask 261120
      %17 = vst.msk [vmem:[#allocation2] sm:$0xff] %vm16, 0.0
      %18 = vst.msk [vmem:[#allocation2 + $0x8] sm:$0xff] %vm16, 0.0
    $region13: #{tpu_custom_call.1} parent=1 // pred_fallthru
      _
    %v19 = vld [vmem:[%s0] sm:$0xff]
    %v20 = vld [vmem:[%s0 + $0x8] sm:$0xff]
    %v21 = vlaneseq
    %v22 = vand.u32 %v21, 127
    %s23 = smul.u32 0, 64
    %v24 = vstv %s23
    %v25 = vadd.s32 %v22, %v24
    %26 = vset.pattern.permute.xlu0 0
    %27 = vperm.xlu0 %26, %v19
    %v28 = vpop.permute.xlu0 %27
    %29 = vset.pattern.permute.xlu0 0
    %30 = vperm.xlu0 %29, %v20
    %v31 = vpop.permute.xlu0 %30
    %vm32 = vcmp.eq.s32.totalorder %v25, %v28
    %vm33 = vcmp.eq.s32.totalorder %v25, %v31
    %v34 = vsel %vm32, 5.656854, 0.0
    %v35 = vsel %vm33, 5.656854, 0.0
    %v36 = vld [vmem:[#allocation2] sm:$0xff]
    %v37 = vld [vmem:[#allocation2 + $0x8] sm:$0xff]
    %v38 = vld [vmem:[%s1] sm:$0xff]
    %v39 = vld [vmem:[%s1 + $0x8] sm:$0xff]
    %v40 = vld [vmem:[%s1 + $0x10] sm:$0xff]
    %v41 = vld [vmem:[%s1 + $0x18] sm:$0xff]
    %v42 = vld [vmem:[%s1 + $0x20] sm:$0xff]
    %v43 = vld [vmem:[%s1 + $0x28] sm:$0xff]
    %v44 = vld [vmem:[%s1 + $0x30] sm:$0xff]
    %v45 = vld [vmem:[%s1 + $0x38] sm:$0xff]
    %vm46 = vcmask 523264
    %v48 = vsel %vm46, %v34, 0
    %v51 = vsel %vm46, %v35, 0
    %53 = vmatprep.subr.mxu0 0.0
    %54 = vmatpush1.msra.mxu0 0.0
    %55 = vmatprep.subr.mxu0 0.0
    %56 = vmatpush1.msra.mxu0 0.0
    %57 = vmatprep.subr.mxu0 0.0
    %58 = vmatpush1.msra.mxu0 0.0
    %59 = vmatprep.subr.mxu0 0.0
    %60 = vmatpush1.msra.mxu0 0.0
    %61 = vmatprep.subr.mxu0 0.0
    %62 = vmatpush1.msra.mxu0 0.0
    %63 = vmatprep.subr.mxu0 0.0
    %64 = vmatpush1.msra.mxu0 0.0
    %65 = vmatprep.subr.mxu0 0.0
    %66 = vmatpush1.msra.mxu0 0.0
    %67 = vmatprep.subr.mxu0 0.0
    %68 = vmatpush1.msra.mxu0 0.0
    %69 = vmatprep.subr.mxu0 0.0
    %70 = vmatpush1.msra.mxu0 %v45
    %71 = vmatprep.subr.mxu0 0.0
    %72 = vmatpush1.msra.mxu0 %v44
    %73 = vmatprep.subr.mxu0 0.0
    %74 = vmatpush1.msra.mxu0 %v43
    %75 = vmatprep.subr.mxu0 0.0
    %76 = vmatpush1.msra.mxu0 %v42
    %77 = vmatprep.subr.mxu0 0.0
    %78 = vmatpush1.msra.mxu0 %v41
    %79 = vmatprep.subr.mxu0 0.0
    %80 = vmatpush1.msra.mxu0 %v40
    %81 = vmatprep.subr.mxu0 0.0
    %82 = vmatpush1.msra.mxu0 %v39
    %83 = vmatprep.subr.mxu0 0.0
    %84 = vmatpush1.msra.mxu0 %v38
    %85 = vmatprep.subr.mxu0 0.0
    %86 = vmatpush2.msra.mxu0 0.0
    %87 = vmatprep.subr.mxu0 0.0
    %88 = vmatpush2.msra.mxu0 0.0
    %89 = vmatprep.subr.mxu0 0.0
    %90 = vmatpush2.msra.mxu0 0.0
    %91 = vmatprep.subr.mxu0 0.0
    %92 = vmatpush2.msra.mxu0 0.0
    %93 = vmatprep.subr.mxu0 0.0
    %94 = vmatpush2.msra.mxu0 0.0
    %95 = vmatprep.subr.mxu0 0.0
    %96 = vmatpush2.msra.mxu0 0.0
    %97 = vmatprep.subr.mxu0 0.0
    %98 = vmatpush2.msra.mxu0 0.0
    %99 = vmatprep.subr.mxu0 0.0
    %100 = vmatpush2.msra.mxu0 0.0
    %101 = vmatprep.subr.mxu0 0.0
    %102 = vmatpush2.msra.mxu0 0.0
    %103 = vmatprep.subr.mxu0 0.0
    %104 = vmatpush2.msra.mxu0 0.0
    %105 = vmatprep.subr.mxu0 0.0
    %106 = vmatpush2.msra.mxu0 0.0
    %107 = vmatprep.subr.mxu0 0.0
    %108 = vmatpush2.msra.mxu0 0.0
    %109 = vmatprep.subr.mxu0 0.0
    %110 = vmatpush2.msra.mxu0 0.0
    %111 = vmatprep.subr.mxu0 0.0
    %112 = vmatpush2.msra.mxu0 0.0
    %113 = vmatprep.subr.mxu0 0.0
    %114 = vmatpush2.msra.mxu0 0.0
    %115 = vmatprep.subr.mxu0 0.0
    %116 = vmatpush2.msra.mxu0 0.0
    %117 = vmatprep.mubr.f32.mxu0 0.0
    %118 = vmatmul.mubr.f32.gmra.mxu0 %v48
    %v119 = vpop.f32.mrf.mxu0
    %v120 = vadd.f32 0.0, %v119
    %v121 = vpop.f32.mrf.mxu0
    %122 = vmatprep.mubr.f32.mxu0 0.0
    %123 = vmatmul.mubr.f32.gmra.mxu0 %v51
    %v124 = vpop.f32.mrf.mxu0
    %v125 = vadd.f32 0.0, %v124
    %v126 = vpop.f32.mrf.mxu0
    %127 = vdwg.mxu0
    %v128 = vadd.f32 %v36, %v120
    %v129 = vadd.f32 %v37, %v125
    %vm130 = vcmask 261120
    %131 = vst.msk [vmem:[#allocation2] sm:$0xff] %vm130, %v128
    %132 = vst.msk [vmem:[#allocation2 + $0x8] sm:$0xff] %vm130, %v129
    // Predicated region
    $region14: #{tpu_custom_call.1} parent=1 // pred_check
      %p133 = pneg %p12
    $region15: #{tpu_custom_call.1} parent=1 // pred_check_branch
      %135 = sbr.rel (%p133) target = $region17
    $region16: #{tpu_custom_call.1} parent=1 // pred_region
      %v136 = vld [vmem:[#allocation2] sm:$0xff]
      %v137 = vld [vmem:[#allocation2 + $0x8] sm:$0xff]
      %138 = vst.msk [vmem:[#allocation3] sm:$0xff] %vm130, %v136
      %139 = vst.msk [vmem:[#allocation3 + $0x8] sm:$0xff] %vm130, %v137
    $region17: #{tpu_custom_call.1} parent=1 // pred_fallthru
      _
    // Predicated region
    $region18: #{tpu_custom_call.1} parent=1 // pred_check
      _
    $region19: #{tpu_custom_call.1} parent=1 // pred_check_branch
      %141 = sbr.rel (0) target = $region21
    $region20: #{tpu_custom_call.1} parent=1 // pred_region
      %s143 = ssub.s32 256, 256
      %144 = vsyncadd [#allocation4], %s143
      %s145 = sshll.u32 [#allocation3], 4
      %s146 = int_to_ptr.vmem [resolvable:$true] %s145
      %151 = dma.vmem_to_hbm [thread:$0]  %s146, 256, %s2, [#allocation4], 128, 128, 8
    $region21: #{tpu_custom_call.1} parent=1 // pred_fallthru
      _
    // Predicated region
    $region22: #{tpu_custom_call.1} parent=1 // pred_check
      _
    $region23: #{tpu_custom_call.1} parent=1 // pred_check_branch
      %153 = sbr.rel (0) target = $region25
    $region24: #{tpu_custom_call.1} parent=1 // pred_region
      %154 = dma.done [#allocation4], 256
    $region25: #{tpu_custom_call.1} parent=1 // pred_fallthru
      _
    %155 = vsyncpa [#allocation4], 1

</llo_original>
